<compile_context>
chip_gen: v6e
topology: v6e:2x2x1
jax: 0.10.0
libtpu: 0.0.40
codegen_flags: <defaults>
</compile_context>

<pallas_src>
import functools

import jax
import jax.numpy as jnp
from jax import lax
from jax.experimental import pallas as pl
from jax.experimental.pallas import tpu as pltpu

_EPS = 1e-12  # matches torch.nn.functional.normalize default eps


def _cos_classifier_kernel(x_ref, w_ref, o_ref, *, scaler: float):
    # x_ref: (1, Q, C) batch slice; w_ref: (K_pad, C); o_ref: (1, Q, K_pad)
    x = x_ref[0]            # (Q, C)
    w = w_ref[...]          # (K_pad, C)

    # F.normalize(x, p=2, dim=1): per (b, c) column over the query axis.
    x_nrm = jnp.sqrt(jnp.sum(x * x, axis=0, keepdims=True))        # (1, C)
    xn = x / jnp.maximum(x_nrm, _EPS)

    # F.normalize(W, p=2, dim=1): each class-prototype row over channels.
    w_nrm = jnp.sqrt(jnp.sum(w * w, axis=1, keepdims=True))        # (K_pad, 1)
    wn = w / jnp.maximum(w_nrm, _EPS)

    # Cosine logits: xn @ wn.T -- contract the channel dims directly on the MXU.
    y = lax.dot_general(
        xn, wn,
        dimension_numbers=(((1,), (1,)), ((), ())),
        preferred_element_type=jnp.float32)                        # (Q, K_pad)
    o_ref[0] = (scaler * y).astype(o_ref.dtype)


def comformer_cos_classifier(x, weights, *, scaler=10.0):
    """x: (B, Q, C) f32; weights: list of per-task (c_i, C) matrices (no bias)."""
    B, Q, C = x.shape
    # Module output order: cls[1:], then cls[0].
    w_all = jnp.concatenate(list(weights[1:]) + [weights[0]], axis=0)   # (K, C)
    k_total = w_all.shape[0]
    k_pad = ((k_total + 127) // 128) * 128        # lane-dense output stores
    if k_pad != k_total:
        w_all = jnp.pad(w_all, ((0, k_pad - k_total), (0, 0)))

    kernel = functools.partial(_cos_classifier_kernel, scaler=float(scaler))
    out = pl.pallas_call(
        kernel,
        out_shape=jax.ShapeDtypeStruct((B, Q, k_pad), x.dtype),
        grid=(B,),
        in_specs=[
            pl.BlockSpec((1, Q, C), lambda b: (b, 0, 0)),
            pl.BlockSpec((k_pad, C), lambda b: (0, 0)),   # weights stay resident
        ],
        out_specs=pl.BlockSpec((1, Q, k_pad), lambda b: (b, 0, 0)),
        compiler_params=pltpu.CompilerParams(
            dimension_semantics=("parallel",)),
        cost_estimate=pl.CostEstimate(
            flops=2 * B * Q * C * k_pad + 4 * B * Q * C + 4 * k_pad * C,
            transcendentals=B * C + k_pad,
            bytes_accessed=4 * (B * Q * C + k_pad * C + B * Q * k_pad)),
    )(x, w_all)
    return out[..., :k_total]


def comformer_cos_classifier_ref(x, weights, *, scaler=10.0):
    """Plain-JAX reference mirroring the PyTorch forward."""
    xn = x / jnp.maximum(jnp.sqrt(jnp.sum(x * x, axis=1, keepdims=True)), _EPS)
    outs = []
    for w in list(weights[1:]) + [weights[0]]:
        wn = w / jnp.maximum(
            jnp.sqrt(jnp.sum(w * w, axis=1, keepdims=True)), _EPS)
        outs.append(scaler * jnp.einsum("bqc,kc->bqk", xn, wn,
                                        precision=lax.Precision.HIGHEST))
    return jnp.concatenate(outs, axis=2)


if __name__ == "__main__":
    key = jax.random.PRNGKey(0)
    B, Q, C = 2, 8, 32          # small test shapes; real module uses C=256, Q~100
    classes = [4, 3, 5]         # e.g. base task + two incremental tasks
    scaler = 10.0

    keys = jax.random.split(key, 1 + len(classes))
    x = jax.random.normal(keys[0], (B, Q, C), jnp.float32)
    weights = [jax.random.normal(k, (c, C), jnp.float32) / jnp.sqrt(C)
               for k, c in zip(keys[1:], classes)]

    out = comformer_cos_classifier(x, weights, scaler=scaler)
    out = jax.block_until_ready(out)

    ref = comformer_cos_classifier_ref(x, weights, scaler=scaler)
    assert out.shape == (B, Q, sum(classes)), out.shape
    assert jnp.allclose(out, ref, atol=1e-3, rtol=1e-3), "mismatch vs reference"
    print("KERNEL_OK")
</pallas_src>

<mosaic_0001>
module attributes {stable_mosaic.version = 11 : i64} {
  func.func @_cos_classifier_kernel(%arg0: i32, %arg1: memref<1x8x32xf32, #tpu.memory_space<vmem>>, %arg2: memref<128x32xf32, #tpu.memory_space<vmem>>, %arg3: memref<1x8x128xf32, #tpu.memory_space<vmem>>) attributes {dimension_semantics = [#tpu.dimension_semantics<parallel>], iteration_bounds = array<i64: 2>, scalar_prefetch = 0 : i64, scratch_operands = 0 : i64, tpu.core_type = #tpu.core_type<tc>, window_params = [{transform_indices = @transform_0, window_bounds = array<i64: 1, 8, 32>}, {pipeline_mode = #tpu.pipeline_mode<synchronous>, transform_indices = @transform_1, window_bounds = array<i64: 128, 32>}, {transform_indices = @transform_2, window_bounds = array<i64: 1, 8, 128>}]} {
    %c0 = arith.constant 0 : index
    %c0_0 = arith.constant 0 : index
    %c0_1 = arith.constant 0 : index
    %0 = vector.load %arg1[%c0, %c0_0, %c0_1] : memref<1x8x32xf32, #tpu.memory_space<vmem>>, vector<1x8x32xf32>
    %1 = vector.shape_cast %0 : vector<1x8x32xf32> to vector<8x32xf32>
    %c0_2 = arith.constant 0 : index
    %c0_3 = arith.constant 0 : index
    %2 = vector.load %arg2[%c0_2, %c0_3] : memref<128x32xf32, #tpu.memory_space<vmem>>, vector<128x32xf32>
    %3 = arith.mulf %1, %1 : vector<8x32xf32>
    %cst = arith.constant dense<0.000000e+00> : vector<32xf32>
    %4 = vector.multi_reduction <add>, %3, %cst [0] : vector<8x32xf32> to vector<32xf32>
    %5 = vector.shape_cast %4 : vector<32xf32> to vector<1x32xf32>
    %6 = math.sqrt %5 : vector<1x32xf32>
    %cst_4 = arith.constant 9.99999996E-13 : f32
    %7 = vector.broadcast %cst_4 : f32 to vector<1x32xf32>
    %8 = arith.maximumf %6, %7 : vector<1x32xf32>
    %9 = vector.broadcast %8 : vector<1x32xf32> to vector<8x32xf32>
    %10 = arith.divf %1, %9 : vector<8x32xf32>
    %11 = arith.mulf %2, %2 : vector<128x32xf32>
    %cst_5 = arith.constant dense<0.000000e+00> : vector<128xf32>
    %12 = vector.multi_reduction <add>, %11, %cst_5 [1] : vector<128x32xf32> to vector<128xf32>
    %13 = vector.shape_cast %12 : vector<128xf32> to vector<128x1xf32>
    %14 = math.sqrt %13 : vector<128x1xf32>
    %cst_6 = arith.constant 9.99999996E-13 : f32
    %15 = vector.broadcast %cst_6 : f32 to vector<128x1xf32>
    %16 = arith.maximumf %14, %15 : vector<128x1xf32>
    %17 = vector.broadcast %16 : vector<128x1xf32> to vector<128x32xf32>
    %18 = arith.divf %2, %17 : vector<128x32xf32>
    %cst_7 = arith.constant dense<0.000000e+00> : vector<8x128xf32>
    %19 = tpu.matmul %10, %18, %cst_7 {dimension_numbers = #tpu.dot_dimension_numbers<[1], [1], [0], [0], [0, 0, 1, 0], [], []>} : vector<8x32xf32>, vector<128x32xf32>, vector<8x128xf32> -> vector<8x128xf32>
    %cst_8 = arith.constant 1.000000e+01 : f32
    %20 = vector.broadcast %cst_8 : f32 to vector<8x128xf32>
    %21 = arith.mulf %20, %19 : vector<8x128xf32>
    %c0_9 = arith.constant 0 : index
    %c0_10 = arith.constant 0 : index
    %c0_11 = arith.constant 0 : index
    %22 = vector.load %arg3[%c0_9, %c0_10, %c0_11] : memref<1x8x128xf32, #tpu.memory_space<vmem>>, vector<1x8x128xf32>
    %23 = vector.shape_cast %22 : vector<1x8x128xf32> to vector<8x128xf32>
    %24 = vector.shape_cast %21 : vector<8x128xf32> to vector<1x8x128xf32>
    tpu.vector_store %arg3[%c0_9, %c0_10, %c0_11], %24 {strides = array<i32>} : memref<1x8x128xf32, #tpu.memory_space<vmem>>, vector<1x8x128xf32>,
    return
  }
  func.func @transform_0(%arg0: i32) -> (i32, i32, i32) {
    %c0_i32 = arith.constant 0 : i32
    %c0_i32_0 = arith.constant 0 : i32
    %c0_i32_1 = arith.constant 0 : i32
    return %arg0, %c0_i32, %c0_i32_0 : i32, i32, i32
  }
  func.func @transform_1(%arg0: i32) -> (i32, i32) {
    %c0_i32 = arith.constant 0 : i32
    %c0_i32_0 = arith.constant 0 : i32
    %c0_i32_1 = arith.constant 0 : i32
    return %c0_i32, %c0_i32_0 : i32, i32
  }
  func.func @transform_2(%arg0: i32) -> (i32, i32, i32) {
    %c0_i32 = arith.constant 0 : i32
    %c0_i32_0 = arith.constant 0 : i32
    %c0_i32_1 = arith.constant 0 : i32
    return %arg0, %c0_i32, %c0_i32_0 : i32, i32, i32
  }
}

</mosaic_0001>

<llo_original>
// kernel: tpu_custom_call.1
$region0: #{tpu_custom_call.1}
  #allocation0 [shape = 'u32[]', space=smem, size = 0x4, offset = 0x4, fixed_abs, tag = 'smem constant byte address 0x4 - core index']
  #allocation1 [shape = 'u32[144,128]{1,0:T(1,128)}', space=vmem, size = 0x12000, scoped, tag = 'internal scratch']
  %s0 = inlined_call_operand.vmem [shape: f32[2,8,32], index: 0, kind: input, shape index: {}]
  %s1 = inlined_call_operand.vmem [shape: f32[128,32], index: 1, kind: input, shape index: {}]
  %s2 = inlined_call_operand.hbm [shape: f32[2,8,128], index: 2, kind: output, shape index: {}]
  %s3 = sld [smem:[#allocation0]]
  $region41: #{tpu_custom_call.1} parent=0
    _
  %s5 = ssub.s32 1, %s3
  %s6 = scalar_select 0, %s5, %s3
  $region1: #{tpu_custom_call.1} parent=0
    #allocation2 [shape = 'u8[8192]{0}', space=vmem, size = 0x2000, scoped, tag = 'output window, operand 0']
    #allocation3 [shape = 's32[2]{0}', space=sflag, size = 0x8, scoped, tag = 'scoped memory for tpu_custom_call.1']
    %7 = vsyncpa [#allocation3], 0
    %s8 = scalar_lea.sflag [#allocation3], 1
    %9 = vsyncpa %s8, 0
    loop: start=0, step=1, limit=4
    $region2: #{tpu_custom_call.1} parent=1 // loop_pre_header
      _
    $region3: #{tpu_custom_call.1} parent=1 // loop_header
      %s11 = sphi 0, %s15
      %p12 = scmp.ge.s32.totalorder %s11, 4
      %s21 = sphi 0, %s23
      %s24 = sphi 0, %s21
      %s25 = sphi 0, %s24
      %s41 = sphi 0, %s25
      %s45 = sphi 0, %s45
      %s47 = sphi 0, %s45
      %s48 = sphi 0, %s47
      %s62 = sphi 0, %s48
      %s68 = sphi 0, %s70
      %s71 = sphi 0, %s68
      %s72 = sphi 0, %s71
      %s88 = sphi 0, %s72
    $region4: #{tpu_custom_call.1} parent=1 // loop_header_branch
      %14 = sbr.rel (%p12) target = $region8
    $region5: #{tpu_custom_call.1} parent=1 // loop_body
      %s16 = ssub.s32 %s11, 1
      %s17 = ssub.s32 %s11, 2
      %s18 = sadd.s32 %s11, 1
      %s19 = ssub.s32 %s11, %s18
      %p20 = scmp.eq.s32.totalorder %s19, 0
      %s22 = sadd.s32 %s21, 1
      %s23 = scalar_select %p20, %s21, %s22
      %p26 = pneg %p20
      %p27 = scmp.eq.s32.totalorder %s11, 1
      %p28 = por %p26, %p27
      %p29 = scmp.ne.s32.totalorder %s21, %s24
      %p30 = scmp.eq.s32.totalorder %s11, 0
      %p31 = por %p29, %p30
      %p32 = scmp.ne.s32.totalorder %s21, %s24
      %p33 = scmp.eq.s32.totalorder %s16, 1
      %p34 = por %p32, %p33
      %p35 = scmp.ne.s32.totalorder %s24, %s25
      %p36 = scmp.eq.s32.totalorder %s16, 0
      %p37 = por %p35, %p36
      %p38 = scmp.ne.s32.totalorder %s24, %s25
      %p39 = scmp.eq.s32.totalorder %s17, 1
      %p40 = por %p38, %p39
      %p42 = scmp.ne.s32.totalorder %s25, %s41
      %p43 = scmp.eq.s32.totalorder %s17, 0
      %p44 = por %p42, %p43
      %s46 = sadd.s32 %s45, 1
      %p49 = scmp.eq.s32.totalorder %s11, 1
      %p50 = scmp.ne.s32.totalorder %s45, %s47
      %p51 = scmp.eq.s32.totalorder %s11, 0
      %p52 = por %p50, %p51
      %p53 = scmp.ne.s32.totalorder %s45, %s47
      %p54 = scmp.eq.s32.totalorder %s16, 1
      %p55 = por %p53, %p54
      %p56 = scmp.ne.s32.totalorder %s47, %s48
      %p57 = scmp.eq.s32.totalorder %s16, 0
      %p58 = por %p56, %p57
      %p59 = scmp.ne.s32.totalorder %s47, %s48
      %p60 = scmp.eq.s32.totalorder %s17, 1
      %p61 = por %p59, %p60
      %p63 = scmp.ne.s32.totalorder %s48, %s62
      %p64 = scmp.eq.s32.totalorder %s17, 0
      %p65 = por %p63, %p64
      %s66 = ssub.s32 %s11, %s18
      %p67 = scmp.eq.s32.totalorder %s66, 0
      %s69 = sadd.s32 %s68, 1
      %s70 = scalar_select %p67, %s68, %s69
      %p73 = pneg %p67
      %p74 = scmp.eq.s32.totalorder %s11, 1
      %p75 = por %p73, %p74
      %p76 = scmp.ne.s32.totalorder %s68, %s71
      %p77 = scmp.eq.s32.totalorder %s11, 0
      %p78 = por %p76, %p77
      %p79 = scmp.ne.s32.totalorder %s68, %s71
      %p80 = scmp.eq.s32.totalorder %s16, 1
      %p81 = por %p79, %p80
      %p82 = scmp.ne.s32.totalorder %s71, %s72
      %p83 = scmp.eq.s32.totalorder %s16, 0
      %p84 = por %p82, %p83
      %p85 = scmp.ne.s32.totalorder %s71, %s72
      %p86 = scmp.eq.s32.totalorder %s17, 1
      %p87 = por %p85, %p86
      %p89 = scmp.ne.s32.totalorder %s72, %s88
      %p90 = scmp.eq.s32.totalorder %s17, 0
      %p91 = por %p89, %p90
      %p92 = scmp.le.s32.totalorder 1, %s11
      %p93 = scmp.lt.s32.totalorder %s11, 3
      %p94 = pnand %p92, %p93
      %p95 = pneg %p94
      // Predicated region
      $region9: #{tpu_custom_call.1} parent=5 // pred_check
        _
      $region10: #{tpu_custom_call.1} parent=5 // pred_check_branch
        %97 = sbr.rel (%p94) target = $region12
      $region11: #{tpu_custom_call.1} parent=5 // pred_region
        %s98 = ssub.s32 %s11, 1
        // Predicated region
        $region13: #{tpu_custom_call.1} parent=11 // pred_check
          %p99 = pneg %p58
        $region14: #{tpu_custom_call.1} parent=11 // pred_check_branch
          %101 = sbr.rel (%p99) target = $region16
        $region15: #{tpu_custom_call.1} parent=11 // pred_region
          _
        $region16: #{tpu_custom_call.1} parent=11 // pred_fallthru
          _
      $region12: #{tpu_custom_call.1} parent=5 // pred_fallthru
        _
      %p102 = scmp.lt.s32.totalorder %s11, 2
      // Predicated region
      $region17: #{tpu_custom_call.1} parent=5 // pred_check
        %p103 = pneg %p102
      $region18: #{tpu_custom_call.1} parent=5 // pred_check_branch
        %105 = sbr.rel (%p103) target = $region20
      $region19: #{tpu_custom_call.1} parent=5 // pred_region
        // Predicated region
        $region21: #{tpu_custom_call.1} parent=19 // pred_check
          %p106 = pneg %p31
        $region22: #{tpu_custom_call.1} parent=19 // pred_check_branch
          %108 = sbr.rel (%p106) target = $region24
        $region23: #{tpu_custom_call.1} parent=19 // pred_region
          %p109 = scmp.lt.s32.totalorder %s11, 1
          %s110 = scalar_select %p109, %s11, 1
          %s111 = smul.addr %s110, 8
          %s112 = scalar_lea.vmem %s0, %s111
        $region24: #{tpu_custom_call.1} parent=19 // pred_fallthru
          _
      $region20: #{tpu_custom_call.1} parent=5 // pred_fallthru
        _
      %p113 = scmp.le.s32.totalorder 1, %s11
      %p114 = scmp.lt.s32.totalorder %s11, 3
      %p115 = pnand %p113, %p114
      %p116 = pneg %p115
      // Predicated region
      $region25: #{tpu_custom_call.1} parent=5 // pred_check
        _
      $region26: #{tpu_custom_call.1} parent=5 // pred_check_branch
        %118 = sbr.rel (%p115) target = $region28
      $region27: #{tpu_custom_call.1} parent=5 // pred_region
        %s119 = ssub.s32 %s11, 1
        %p120 = scmp.lt.s32.totalorder %s16, 1
        %s121 = scalar_select %p120, %s16, 1
        %s122 = smul.addr %s121, 8
        %s123 = scalar_lea.vmem %s0, %s122
        %p124 = pneg %p37
        %p125 = pneg %p34
        %p126 = pneg %p58
        %p127 = pneg %p55
        %p128 = pneg %p84
        %p129 = pneg %p81
        %s130 = sand.u32 %s71, 1
        %s131 = scalar_lea.sflag [#allocation3], %s130
        %s132 = sand.u32 %s71, 1
        %s133 = smul.addr %s132, 8
        %s134 = scalar_lea.vmem [#allocation2], %s133
        %p135 = scmp.lt.s32.totalorder %s16, 1
        %s136 = scalar_select %p135, %s16, 1
        %s137 = smul.addr %s136, 8
        %s138 = scalar_lea.vmem %s0, %s137
        %v139 = vld [vmem:[%s138] sm:$0xff]
        %v140 = vld [vmem:[%s1] sm:$0xff]
        %v141 = vld [vmem:[%s1 + $0x8] sm:$0xff]
        %v142 = vld [vmem:[%s1 + $0x10] sm:$0xff]
        %v143 = vld [vmem:[%s1 + $0x18] sm:$0xff]
        %v144 = vld [vmem:[%s1 + $0x20] sm:$0xff]
        %v145 = vld [vmem:[%s1 + $0x28] sm:$0xff]
        %v146 = vld [vmem:[%s1 + $0x30] sm:$0xff]
        %v147 = vld [vmem:[%s1 + $0x38] sm:$0xff]
        %v148 = vld [vmem:[%s1 + $0x40] sm:$0xff]
        %v149 = vld [vmem:[%s1 + $0x48] sm:$0xff]
        %v150 = vld [vmem:[%s1 + $0x50] sm:$0xff]
        %v151 = vld [vmem:[%s1 + $0x58] sm:$0xff]
        %v152 = vld [vmem:[%s1 + $0x60] sm:$0xff]
        %v153 = vld [vmem:[%s1 + $0x68] sm:$0xff]
        %v154 = vld [vmem:[%s1 + $0x70] sm:$0xff]
        %v155 = vld [vmem:[%s1 + $0x78] sm:$0xff]
        %v156 = vmul.f32 %v139, %v139
        %vm157 = vcmask 261120
        %v158 = vsel %vm157, %v156, 0.0
        %v159 = vrot.slane %v158, 4
        %v160 = vadd.f32 %v158, %v159
        %v161 = vrot.slane %v160, 2
        %v162 = vadd.f32 %v160, %v161
        %v163 = vrot.slane %v162, 1
        %v164 = vadd.f32 %v162, %v163
        %v165 = vrsqrt.pop %v164
        %v166 = vmul.f32 %v164, %v165
        %vm167 = vcmp.eq.f32.partialorder %v164, inf
        %v168 = vsel %vm167, %v164, %v166
        %vm169 = vcmp.eq.f32.partialorder %v164, 0.0
        %v170 = vand.u32 %v164, 2147483648
        %v171 = vsel %vm169, %v170, %v168
        %v172 = vmax.f32 %v171, 1e-12
        %v173 = vrcp.pop %v172
        %v174 = vmul.f32 %v139, %v173
        %v175 = vmul.f32 %v140, %v140
        %v176 = vmul.f32 %v141, %v141
        %v177 = vmul.f32 %v142, %v142
        %v178 = vmul.f32 %v143, %v143
        %v179 = vmul.f32 %v144, %v144
        %v180 = vmul.f32 %v145, %v145
        %v181 = vmul.f32 %v146, %v146
        %v182 = vmul.f32 %v147, %v147
        %v183 = vmul.f32 %v148, %v148
        %v184 = vmul.f32 %v149, %v149
        %v185 = vmul.f32 %v150, %v150
        %v186 = vmul.f32 %v151, %v151
        %v187 = vmul.f32 %v152, %v152
        %v188 = vmul.f32 %v153, %v153
        %v189 = vmul.f32 %v154, %v154
        %v190 = vmul.f32 %v155, %v155
        %v191 = vsel %vm157, %v175, 0.0
        %192 = vadd.xlane.f32.xlu0 %v191
        %v193 = vpop.xlane.xlu0 %192
        %v194 = vsel %vm157, %v176, 0.0
        %195 = vadd.xlane.f32.xlu0 %v194
        %v196 = vpop.xlane.xlu0 %195
        %v197 = vsel %vm157, %v177, 0.0
        %198 = vadd.xlane.f32.xlu0 %v197
        %v199 = vpop.xlane.xlu0 %198
        %v200 = vsel %vm157, %v178, 0.0
        %201 = vadd.xlane.f32.xlu0 %v200
        %v202 = vpop.xlane.xlu0 %201
        %v203 = vsel %vm157, %v179, 0.0
        %204 = vadd.xlane.f32.xlu0 %v203
        %v205 = vpop.xlane.xlu0 %204
        %v206 = vsel %vm157, %v180, 0.0
        %207 = vadd.xlane.f32.xlu0 %v206
        %v208 = vpop.xlane.xlu0 %207
        %v209 = vsel %vm157, %v181, 0.0
        %210 = vadd.xlane.f32.xlu0 %v209
        %v211 = vpop.xlane.xlu0 %210
        %v212 = vsel %vm157, %v182, 0.0
        %213 = vadd.xlane.f32.xlu0 %v212
        %v214 = vpop.xlane.xlu0 %213
        %v215 = vsel %vm157, %v183, 0.0
        %216 = vadd.xlane.f32.xlu0 %v215
        %v217 = vpop.xlane.xlu0 %216
        %v218 = vsel %vm157, %v184, 0.0
        %219 = vadd.xlane.f32.xlu0 %v218
        %v220 = vpop.xlane.xlu0 %219
        %v221 = vsel %vm157, %v185, 0.0
        %222 = vadd.xlane.f32.xlu0 %v221
        %v223 = vpop.xlane.xlu0 %222
        %v224 = vsel %vm157, %v186, 0.0
        %225 = vadd.xlane.f32.xlu0 %v224
        %v226 = vpop.xlane.xlu0 %225
        %v227 = vsel %vm157, %v187, 0.0
        %228 = vadd.xlane.f32.xlu0 %v227
        %v229 = vpop.xlane.xlu0 %228
        %v230 = vsel %vm157, %v188, 0.0
        %231 = vadd.xlane.f32.xlu0 %v230
        %v232 = vpop.xlane.xlu0 %231
        %v233 = vsel %vm157, %v189, 0.0
        %234 = vadd.xlane.f32.xlu0 %v233
        %v235 = vpop.xlane.xlu0 %234
        %v236 = vsel %vm157, %v190, 0.0
        %237 = vadd.xlane.f32.xlu0 %v236
        %v238 = vpop.xlane.xlu0 %237
        %v239 = vrsqrt.pop %v193
        %v240 = vmul.f32 %v193, %v239
        %vm241 = vcmp.eq.f32.partialorder %v193, inf
        %v242 = vsel %vm241, %v193, %v240
        %vm243 = vcmp.eq.f32.partialorder %v193, 0.0
        %v244 = vand.u32 %v193, 2147483648
        %v245 = vsel %vm243, %v244, %v242
        %v246 = vrsqrt.pop %v196
        %v247 = vmul.f32 %v196, %v246
        %vm248 = vcmp.eq.f32.partialorder %v196, inf
        %v249 = vsel %vm248, %v196, %v247
        %vm250 = vcmp.eq.f32.partialorder %v196, 0.0
        %v251 = vand.u32 %v196, 2147483648
        %v252 = vsel %vm250, %v251, %v249
        %v253 = vrsqrt.pop %v199
        %v254 = vmul.f32 %v199, %v253
        %vm255 = vcmp.eq.f32.partialorder %v199, inf
        %v256 = vsel %vm255, %v199, %v254
        %vm257 = vcmp.eq.f32.partialorder %v199, 0.0
        %v258 = vand.u32 %v199, 2147483648
        %v259 = vsel %vm257, %v258, %v256
        %v260 = vrsqrt.pop %v202
        %v261 = vmul.f32 %v202, %v260
        %vm262 = vcmp.eq.f32.partialorder %v202, inf
        %v263 = vsel %vm262, %v202, %v261
        %vm264 = vcmp.eq.f32.partialorder %v202, 0.0
        %v265 = vand.u32 %v202, 2147483648
        %v266 = vsel %vm264, %v265, %v263
        %v267 = vrsqrt.pop %v205
        %v268 = vmul.f32 %v205, %v267
        %vm269 = vcmp.eq.f32.partialorder %v205, inf
        %v270 = vsel %vm269, %v205, %v268
        %vm271 = vcmp.eq.f32.partialorder %v205, 0.0
        %v272 = vand.u32 %v205, 2147483648
        %v273 = vsel %vm271, %v272, %v270
        %v274 = vrsqrt.pop %v208
        %v275 = vmul.f32 %v208, %v274
        %vm276 = vcmp.eq.f32.partialorder %v208, inf
        %v277 = vsel %vm276, %v208, %v275
        %vm278 = vcmp.eq.f32.partialorder %v208, 0.0
        %v279 = vand.u32 %v208, 2147483648
        %v280 = vsel %vm278, %v279, %v277
        %v281 = vrsqrt.pop %v211
        %v282 = vmul.f32 %v211, %v281
        %vm283 = vcmp.eq.f32.partialorder %v211, inf
        %v284 = vsel %vm283, %v211, %v282
        %vm285 = vcmp.eq.f32.partialorder %v211, 0.0
        %v286 = vand.u32 %v211, 2147483648
        %v287 = vsel %vm285, %v286, %v284
        %v288 = vrsqrt.pop %v214
        %v289 = vmul.f32 %v214, %v288
        %vm290 = vcmp.eq.f32.partialorder %v214, inf
        %v291 = vsel %vm290, %v214, %v289
        %vm292 = vcmp.eq.f32.partialorder %v214, 0.0
        %v293 = vand.u32 %v214, 2147483648
        %v294 = vsel %vm292, %v293, %v291
        %v295 = vrsqrt.pop %v217
        %v296 = vmul.f32 %v217, %v295
        %vm297 = vcmp.eq.f32.partialorder %v217, inf
        %v298 = vsel %vm297, %v217, %v296
        %vm299 = vcmp.eq.f32.partialorder %v217, 0.0
        %v300 = vand.u32 %v217, 2147483648
        %v301 = vsel %vm299, %v300, %v298
        %v302 = vrsqrt.pop %v220
        %v303 = vmul.f32 %v220, %v302
        %vm304 = vcmp.eq.f32.partialorder %v220, inf
        %v305 = vsel %vm304, %v220, %v303
        %vm306 = vcmp.eq.f32.partialorder %v220, 0.0
        %v307 = vand.u32 %v220, 2147483648
        %v308 = vsel %vm306, %v307, %v305
        %v309 = vrsqrt.pop %v223
        %v310 = vmul.f32 %v223, %v309
        %vm311 = vcmp.eq.f32.partialorder %v223, inf
        %v312 = vsel %vm311, %v223, %v310
        %vm313 = vcmp.eq.f32.partialorder %v223, 0.0
        %v314 = vand.u32 %v223, 2147483648
        %v315 = vsel %vm313, %v314, %v312
        %v316 = vrsqrt.pop %v226
        %v317 = vmul.f32 %v226, %v316
        %vm318 = vcmp.eq.f32.partialorder %v226, inf
        %v319 = vsel %vm318, %v226, %v317
        %vm320 = vcmp.eq.f32.partialorder %v226, 0.0
        %v321 = vand.u32 %v226, 2147483648
        %v322 = vsel %vm320, %v321, %v319
        %v323 = vrsqrt.pop %v229
        %v324 = vmul.f32 %v229, %v323
        %vm325 = vcmp.eq.f32.partialorder %v229, inf
        %v326 = vsel %vm325, %v229, %v324
        %vm327 = vcmp.eq.f32.partialorder %v229, 0.0
        %v328 = vand.u32 %v229, 2147483648
        %v329 = vsel %vm327, %v328, %v326
        %v330 = vrsqrt.pop %v232
        %v331 = vmul.f32 %v232, %v330
        %vm332 = vcmp.eq.f32.partialorder %v232, inf
        %v333 = vsel %vm332, %v232, %v331
        %vm334 = vcmp.eq.f32.partialorder %v232, 0.0
        %v335 = vand.u32 %v232, 2147483648
        %v336 = vsel %vm334, %v335, %v333
        %v337 = vrsqrt.pop %v235
        %v338 = vmul.f32 %v235, %v337
        %vm339 = vcmp.eq.f32.partialorder %v235, inf
        %v340 = vsel %vm339, %v235, %v338
        %vm341 = vcmp.eq.f32.partialorder %v235, 0.0
        %v342 = vand.u32 %v235, 2147483648
        %v343 = vsel %vm341, %v342, %v340
        %v344 = vrsqrt.pop %v238
        %v345 = vmul.f32 %v238, %v344
        %vm346 = vcmp.eq.f32.partialorder %v238, inf
        %v347 = vsel %vm346, %v238, %v345
        %vm348 = vcmp.eq.f32.partialorder %v238, 0.0
        %v349 = vand.u32 %v238, 2147483648
        %v350 = vsel %vm348, %v349, %v347
        %v351 = vmax.f32 %v245, 1e-12
        %v352 = vmax.f32 %v252, 1e-12
        %v353 = vmax.f32 %v259, 1e-12
        %v354 = vmax.f32 %v266, 1e-12
        %v355 = vmax.f32 %v273, 1e-12
        %v356 = vmax.f32 %v280, 1e-12
        %v357 = vmax.f32 %v287, 1e-12
        %v358 = vmax.f32 %v294, 1e-12
        %v359 = vmax.f32 %v301, 1e-12
        %v360 = vmax.f32 %v308, 1e-12
        %v361 = vmax.f32 %v315, 1e-12
        %v362 = vmax.f32 %v322, 1e-12
        %v363 = vmax.f32 %v329, 1e-12
        %v364 = vmax.f32 %v336, 1e-12
        %v365 = vmax.f32 %v343, 1e-12
        %v366 = vmax.f32 %v350, 1e-12
        %v367 = vrcp.pop %v351
        %v368 = vmul.f32 %v140, %v367
        %v369 = vrcp.pop %v352
        %v370 = vmul.f32 %v141, %v369
        %v371 = vrcp.pop %v353
        %v372 = vmul.f32 %v142, %v371
        %v373 = vrcp.pop %v354
        %v374 = vmul.f32 %v143, %v373
        %v375 = vrcp.pop %v355
        %v376 = vmul.f32 %v144, %v375
        %v377 = vrcp.pop %v356
        %v378 = vmul.f32 %v145, %v377
        %v379 = vrcp.pop %v357
        %v380 = vmul.f32 %v146, %v379
        %v381 = vrcp.pop %v358
        %v382 = vmul.f32 %v147, %v381
        %v383 = vrcp.pop %v359
        %v384 = vmul.f32 %v148, %v383
        %v385 = vrcp.pop %v360
        %v386 = vmul.f32 %v149, %v385
        %v387 = vrcp.pop %v361
        %v388 = vmul.f32 %v150, %v387
        %v389 = vrcp.pop %v362
        %v390 = vmul.f32 %v151, %v389
        %v391 = vrcp.pop %v363
        %v392 = vmul.f32 %v152, %v391
        %v393 = vrcp.pop %v364
        %v394 = vmul.f32 %v153, %v393
        %v395 = vrcp.pop %v365
        %v396 = vmul.f32 %v154, %v395
        %v397 = vrcp.pop %v366
        %v398 = vmul.f32 %v155, %v397
        %v400 = vsel %vm157, %v174, 0
        %v403 = vsel %vm157, %v368, 0
        %v406 = vsel %vm157, %v370, 0
        %v409 = vsel %vm157, %v372, 0
        %v412 = vsel %vm157, %v374, 0
        %v415 = vsel %vm157, %v376, 0
        %v418 = vsel %vm157, %v378, 0
        %v421 = vsel %vm157, %v380, 0
        %v424 = vsel %vm157, %v382, 0
        %v427 = vsel %vm157, %v384, 0
        %v430 = vsel %vm157, %v386, 0
        %v433 = vsel %vm157, %v388, 0
        %v436 = vsel %vm157, %v390, 0
        %v439 = vsel %vm157, %v392, 0
        %v442 = vsel %vm157, %v394, 0
        %v445 = vsel %vm157, %v396, 0
        %v448 = vsel %vm157, %v398, 0
        %450 = vmatprep.subr.mxu0 0.0
        %451 = vmatpush1.xpose.msra.mxu0 %v448
        %452 = vmatprep.subr.mxu0 0.0
        %453 = vmatpush1.xpose.msra.mxu0 %v445
        %454 = vmatprep.subr.mxu0 0.0
        %455 = vmatpush1.xpose.msra.mxu0 %v442
        %456 = vmatprep.subr.mxu0 0.0
        %457 = vmatpush1.xpose.msra.mxu0 %v439
        %458 = vmatprep.subr.mxu0 0.0
        %459 = vmatpush1.xpose.msra.mxu0 %v436
        %460 = vmatprep.subr.mxu0 0.0
        %461 = vmatpush1.xpose.msra.mxu0 %v433
        %462 = vmatprep.subr.mxu0 0.0
        %463 = vmatpush1.xpose.msra.mxu0 %v430
        %464 = vmatprep.subr.mxu0 0.0
        %465 = vmatpush1.xpose.msra.mxu0 %v427
        %466 = vmatprep.subr.mxu0 0.0
        %467 = vmatpush1.xpose.msra.mxu0 %v424
        %468 = vmatprep.subr.mxu0 0.0
        %469 = vmatpush1.xpose.msra.mxu0 %v421
        %470 = vmatprep.subr.mxu0 0.0
        %471 = vmatpush1.xpose.msra.mxu0 %v418
        %472 = vmatprep.subr.mxu0 0.0
        %473 = vmatpush1.xpose.msra.mxu0 %v415
        %474 = vmatprep.subr.mxu0 0.0
        %475 = vmatpush1.xpose.msra.mxu0 %v412
        %476 = vmatprep.subr.mxu0 0.0
        %477 = vmatpush1.xpose.msra.mxu0 %v409
        %478 = vmatprep.subr.mxu0 0.0
        %479 = vmatpush1.xpose.msra.mxu0 %v406
        %480 = vmatprep.subr.mxu0 0.0
        %481 = vmatpush1.xpose.msra.mxu0 %v403
        %482 = vmatprep.subr.mxu0 0.0
        %483 = vmatpush2.xpose.msra.mxu0 0.0
        %484 = vmatprep.subr.mxu0 0.0
        %485 = vmatpush2.xpose.msra.mxu0 0.0
        %486 = vmatprep.subr.mxu0 0.0
        %487 = vmatpush2.xpose.msra.mxu0 0.0
        %488 = vmatprep.subr.mxu0 0.0
        %489 = vmatpush2.xpose.msra.mxu0 0.0
        %490 = vmatprep.subr.mxu0 0.0
        %491 = vmatpush2.xpose.msra.mxu0 0.0
        %492 = vmatprep.subr.mxu0 0.0
        %493 = vmatpush2.xpose.msra.mxu0 0.0
        %494 = vmatprep.subr.mxu0 0.0
        %495 = vmatpush2.xpose.msra.mxu0 0.0
        %496 = vmatprep.subr.mxu0 0.0
        %497 = vmatpush2.xpose.msra.mxu0 0.0
        %498 = vmatprep.subr.mxu0 0.0
        %499 = vmatpush2.xpose.msra.mxu0 0.0
        %500 = vmatprep.subr.mxu0 0.0
        %501 = vmatpush2.xpose.msra.mxu0 0.0
        %502 = vmatprep.subr.mxu0 0.0
        %503 = vmatpush2.xpose.msra.mxu0 0.0
        %504 = vmatprep.subr.mxu0 0.0
        %505 = vmatpush2.xpose.msra.mxu0 0.0
        %506 = vmatprep.subr.mxu0 0.0
        %507 = vmatpush2.xpose.msra.mxu0 0.0
        %508 = vmatprep.subr.mxu0 0.0
        %509 = vmatpush2.xpose.msra.mxu0 0.0
        %510 = vmatprep.subr.mxu0 0.0
        %511 = vmatpush2.xpose.msra.mxu0 0.0
        %512 = vmatprep.subr.mxu0 0.0
        %513 = vmatpush2.xpose.msra.mxu0 0.0
        %514 = vmatprep.mubr.f32.mxu0 0.0
        %515 = vmatmul.mubr.f32.gmra.mxu0 %v400
        %v516 = vpop.f32.mrf.mxu0
        %v517 = vadd.f32 0.0, %v516
        %v518 = vpop.f32.mrf.mxu0
        %519 = vdwg.mxu0
        %v520 = vmul.f32 %v517, 10.0
        %521 = vst [vmem:[%s134] sm:$0xff] %v520
        %s522 = sand.u32 %s71, 1
        %s523 = scalar_lea.sflag [#allocation3], %s522
        %s524 = sand.u32 %s71, 1
        %s525 = smul.addr %s524, 8
        %s526 = scalar_lea.vmem [#allocation2], %s525
        // Predicated region
        $region29: #{tpu_custom_call.1} parent=27 // pred_check
          %p527 = pneg %p81
        $region30: #{tpu_custom_call.1} parent=27 // pred_check_branch
          %529 = sbr.rel (%p527) target = $region32
        $region31: #{tpu_custom_call.1} parent=27 // pred_region
          %s531 = ssub.s32 128, 128
          %532 = vsyncadd %s523, %s531
          %s533 = smul.addr %s16, 128
          %s534 = scalar_lea.hbm %s2, %s533
          %s536 = sshll.u32 %s526, 4
          %s537 = int_to_ptr.vmem [resolvable:$true] %s536
          %539 = dma.vmem_to_hbm [thread:$0]  %s537, 128, %s534, %s523
        $region32: #{tpu_custom_call.1} parent=27 // pred_fallthru
          _
      $region28: #{tpu_custom_call.1} parent=5 // pred_fallthru
        _
      %p540 = scmp.le.s32.totalorder 2, %s11
      // Predicated region
      $region33: #{tpu_custom_call.1} parent=5 // pred_check
        %p541 = pneg %p540
      $region34: #{tpu_custom_call.1} parent=5 // pred_check_branch
        %543 = sbr.rel (%p541) target = $region36
      $region35: #{tpu_custom_call.1} parent=5 // pred_region
        %s544 = ssub.s32 %s11, 2
        // Predicated region
        $region37: #{tpu_custom_call.1} parent=35 // pred_check
          %p545 = pneg %p87
        $region38: #{tpu_custom_call.1} parent=35 // pred_check_branch
          %547 = sbr.rel (%p545) target = $region40
        $region39: #{tpu_custom_call.1} parent=35 // pred_region
          %s548 = sand.u32 %s72, 1
          %s549 = scalar_lea.sflag [#allocation3], %s548
          %s550 = sand.u32 %s72, 1
          %s551 = smul.addr %s550, 8
          %s552 = scalar_lea.vmem [#allocation2], %s551
          %553 = dma.done %s549, 128
        $region40: #{tpu_custom_call.1} parent=35 // pred_fallthru
          _
      $region36: #{tpu_custom_call.1} parent=5 // pred_fallthru
        _
    $region6: #{tpu_custom_call.1} parent=1 // loop_footer
      %s15 = sadd.s32 1, %s11
    $region7: #{tpu_custom_call.1} parent=1 // loop_footer_branch
      %10 = sbr.rel target = $region3
    $region8: #{tpu_custom_call.1} parent=1 // loop_exit
      _
    %554 = vsyncpa [#allocation3], 1
    %s555 = scalar_lea.sflag [#allocation3], 1
    %556 = vsyncpa %s555, 1

</llo_original>
